<compile_context>
chip_gen: v6e
topology: v6e:2x2x1
jax: 0.10.0
libtpu: 0.0.40
codegen_flags: <defaults>
</compile_context>

<pallas_src>
import math

import numpy as np
import jax
import jax.numpy as jnp
from jax.experimental import pallas as pl
from jax.experimental.pallas import tpu as pltpu


def _pe1d_kernel(angle0_ref, step_ref, out_ref):
    # angle0_ref / step_ref : (tile_rows, 128) f32, same block for every grid
    #   step (constant index_map -> fetched once).
    # out_ref : (tile_rows, 128) block of the flat (num_rows, 128) slab.
    # out[r, l] = sin(angle0[r, l] + t * step[r, l])
    t = pl.program_id(0).astype(jnp.float32)
    out_ref[...] = jnp.sin(angle0_ref[...] + t * step_ref[...]).astype(out_ref.dtype)


def _round_down(v, m):
    return (v // m) * m


def _pick_tile_rows(num_rows, row_period, itemsize, budget_bytes=2 << 20):
    """Pick the row-tile size for the flat (num_rows, 128) output.

    Constraints:
      * tile_rows % lcm(row_period, sublane_mult) == 0, or tile_rows == num_rows
        (row_period keeps the per-tile channel/position pattern tile-invariant).
      * ~budget_bytes per output buffer (Pallas double-buffers it).
      * >= 2 grid steps when possible so the "parallel" axis can use both
        TensorCores on v7x.
    """
    sublane_mult = max(8, 32 // itemsize)          # f32: 8, bf16: 16, int8/fp8: 32
    step = (row_period * sublane_mult) // math.gcd(row_period, sublane_mult)
    budget_rows = max(step, _round_down(budget_bytes // (128 * itemsize), step))
    if num_rows <= step:
        return int(num_rows)                       # single full block
    half = -(-num_rows // 2)                       # ceil(num_rows / 2)
    tile = min(budget_rows, max(step, half))
    return int(max(step, _round_down(tile, step)))


def positional_encoding_1d(tensor, org_channels):
    """Pallas equivalent of PositionalEncoding1D(org_channels)(tensor)."""
    if tensor.ndim != 3:
        raise RuntimeError("The input tensor has to be 3d!")
    batch_size, x, orig_ch = tensor.shape
    assert orig_ch == org_channels

    out_dtype = tensor.dtype
    itemsize = jnp.dtype(out_dtype).itemsize

    # inv_freq exactly as in the module's __init__ (f32 throughout).
    c_pad = int(np.ceil(org_channels / 2) * 2)
    inv_freq = (
        np.float32(1.0)
        / np.float32(10000.0)
        ** (np.arange(0, c_pad, 2, dtype=np.float32) / np.float32(c_pad))
    ).astype(np.float32)

    # Flat lane-dense layout: element f = pos * c_pad + chan lives at
    # (row, lane) = (f // 128, f % 128) of a (num_rows, 128) slab.
    total = x * c_pad
    num_rows = -(-total // 128)                          # ceil
    row_period = c_pad // math.gcd(c_pad, 128)           # channel pattern repeats every row_period rows
    tile_rows = _pick_tile_rows(num_rows, row_period, itemsize)
    grid_steps = -(-num_rows // tile_rows)

    # Host-precomputed per-tile angle pattern (exact integer arithmetic).
    lf = np.arange(tile_rows * 128, dtype=np.int64).reshape(tile_rows, 128)
    chan = lf % c_pad
    pos_local = (lf // c_pad).astype(np.float32)
    freq = inv_freq[chan // 2]                           # (tile_rows, 128) f32
    phase = (chan % 2).astype(np.float32) * np.float32(np.pi / 2)   # cos(x) = sin(x + pi/2)
    angle0 = (pos_local * freq + phase).astype(np.float32)
    # Positions advanced per grid step; integer whenever grid_steps > 1 because
    # tile_rows % row_period == 0 in that case.
    pos_per_tile = np.float32((tile_rows * 128) // c_pad)
    angle_step = (pos_per_tile * freq).astype(np.float32)

    n_elems = num_rows * 128
    out2d = pl.pallas_call(
        _pe1d_kernel,
        out_shape=jax.ShapeDtypeStruct((num_rows, 128), out_dtype),
        grid=(grid_steps,),
        in_specs=[
            pl.BlockSpec((tile_rows, 128), lambda t: (0, 0)),
            pl.BlockSpec((tile_rows, 128), lambda t: (0, 0)),
        ],
        out_specs=pl.BlockSpec((tile_rows, 128), lambda t: (t, 0)),
        compiler_params=pltpu.CompilerParams(
            dimension_semantics=("parallel",)
        ),
        cost_estimate=pl.CostEstimate(
            flops=4 * n_elems,
            transcendentals=n_elems,
            bytes_accessed=n_elems * itemsize + 2 * tile_rows * 128 * 4,
        ),
    )(jnp.asarray(angle0), jnp.asarray(angle_step))

    emb = out2d.reshape(-1)[:total].reshape(x, c_pad)[:, :orig_ch]
    # Batch dim is a pure broadcast — keep it lazy (no recompute / HBM copy).
    return jnp.broadcast_to(emb[None, :, :], (batch_size, x, orig_ch))


def _reference(tensor, org_channels):
    """Pure-numpy reference mirroring the PyTorch forward."""
    t = np.asarray(tensor)
    batch_size, x, orig_ch = t.shape
    c_pad = int(np.ceil(org_channels / 2) * 2)
    inv_freq = 1.0 / (
        np.float32(10000.0)
        ** (np.arange(0, c_pad, 2, dtype=np.float32) / np.float32(c_pad))
    )
    pos = np.arange(x, dtype=np.float32)
    sin_inp = np.einsum("i,j->ij", pos, inv_freq)
    emb = np.stack((np.sin(sin_inp), np.cos(sin_inp)), axis=-1).reshape(x, c_pad)
    emb = emb.astype(t.dtype)
    return np.broadcast_to(emb[None, :, :orig_ch], (batch_size, x, orig_ch)).copy()


if __name__ == "__main__":
    key = jax.random.PRNGKey(0)

    # Case 1: even channel count, single flat block (c_pad=32, 4 rows of 128).
    B, X, CH = 2, 16, 32
    x_in = jax.random.normal(key, (B, X, CH), dtype=jnp.float32)
    out = jax.block_until_ready(positional_encoding_1d(x_in, CH))
    np.testing.assert_allclose(np.asarray(out), _reference(x_in, CH), rtol=1e-5, atol=1e-5)
    assert out.shape == (B, X, CH) and out.dtype == x_in.dtype

    # Case 2: odd channel count (c_pad=6) — lane-dense flat path, wrapper slice.
    B2, X2, CH2 = 1, 8, 5
    x_in2 = jax.random.normal(jax.random.PRNGKey(0), (B2, X2, CH2), dtype=jnp.float32)
    out2 = jax.block_until_ready(positional_encoding_1d(x_in2, CH2))
    np.testing.assert_allclose(np.asarray(out2), _reference(x_in2, CH2), rtol=1e-5, atol=1e-5)
    assert out2.shape == (B2, X2, CH2) and out2.dtype == x_in2.dtype

    # Case 3: multi-tile grid with a partial last tile (c_pad=40 -> row period 5,
    # 94 rows, 40-row tiles, 3 grid steps).  Looser tolerance: f32 angle
    # recomposition + sin(x+pi/2) at |angle| up to ~300.
    B3, X3, CH3 = 2, 300, 40
    x_in3 = jax.random.normal(jax.random.PRNGKey(0), (B3, X3, CH3), dtype=jnp.float32)
    out3 = jax.block_until_ready(positional_encoding_1d(x_in3, CH3))
    np.testing.assert_allclose(np.asarray(out3), _reference(x_in3, CH3), rtol=1e-3, atol=1e-3)
    assert out3.shape == (B3, X3, CH3) and out3.dtype == x_in3.dtype

    print("KERNEL_OK")
</pallas_src>

<mosaic_0001>
module attributes {stable_mosaic.version = 11 : i64} {
  func.func @_pe1d_kernel(%arg0: i32, %arg1: memref<4x128xf32, #tpu.memory_space<vmem>>, %arg2: memref<4x128xf32, #tpu.memory_space<vmem>>, %arg3: memref<4x128xf32, #tpu.memory_space<vmem>>) attributes {dimension_semantics = [#tpu.dimension_semantics<parallel>], iteration_bounds = array<i64: 1>, scalar_prefetch = 0 : i64, scratch_operands = 0 : i64, tpu.core_type = #tpu.core_type<tc>, window_params = [{pipeline_mode = #tpu.pipeline_mode<synchronous>, transform_indices = @transform_0, window_bounds = array<i64: 4, 128>}, {pipeline_mode = #tpu.pipeline_mode<synchronous>, transform_indices = @transform_1, window_bounds = array<i64: 4, 128>}, {transform_indices = @transform_2, window_bounds = array<i64: 4, 128>}]} {
    %0 = arith.sitofp %arg0 : i32 to f32
    %c0 = arith.constant 0 : index
    %c0_0 = arith.constant 0 : index
    %1 = vector.load %arg1[%c0, %c0_0] : memref<4x128xf32, #tpu.memory_space<vmem>>, vector<4x128xf32>
    %c0_1 = arith.constant 0 : index
    %c0_2 = arith.constant 0 : index
    %2 = vector.load %arg2[%c0_1, %c0_2] : memref<4x128xf32, #tpu.memory_space<vmem>>, vector<4x128xf32>
    %3 = vector.broadcast %0 : f32 to vector<4x128xf32>
    %4 = arith.mulf %3, %2 : vector<4x128xf32>
    %5 = arith.addf %1, %4 : vector<4x128xf32>
    %6 = math.sin %5 : vector<4x128xf32>
    %c0_3 = arith.constant 0 : index
    %c0_4 = arith.constant 0 : index
    %7 = vector.load %arg3[%c0_3, %c0_4] : memref<4x128xf32, #tpu.memory_space<vmem>>, vector<4x128xf32>
    tpu.vector_store %arg3[%c0_3, %c0_4], %6 {strides = array<i32>} : memref<4x128xf32, #tpu.memory_space<vmem>>, vector<4x128xf32>,
    return
  }
  func.func @transform_0(%arg0: i32) -> (i32, i32) {
    %c0_i32 = arith.constant 0 : i32
    %c0_i32_0 = arith.constant 0 : i32
    %c0_i32_1 = arith.constant 0 : i32
    return %c0_i32, %c0_i32_0 : i32, i32
  }
  func.func @transform_1(%arg0: i32) -> (i32, i32) {
    %c0_i32 = arith.constant 0 : i32
    %c0_i32_0 = arith.constant 0 : i32
    %c0_i32_1 = arith.constant 0 : i32
    return %c0_i32, %c0_i32_0 : i32, i32
  }
  func.func @transform_2(%arg0: i32) -> (i32, i32) {
    %c0_i32 = arith.constant 0 : i32
    %c0_i32_0 = arith.constant 0 : i32
    return %arg0, %c0_i32 : i32, i32
  }
}

</mosaic_0001>

<llo_original>
// kernel: tpu_custom_call.1
$region0: #{tpu_custom_call.1}
  #allocation0 [shape = 'u32[]', space=smem, size = 0x4, offset = 0x4, fixed_abs, tag = 'smem constant byte address 0x4 - core index']
  #allocation1 [shape = 'u32[144,128]{1,0:T(1,128)}', space=vmem, size = 0x12000, scoped, tag = 'internal scratch']
  %s0 = inlined_call_operand.hbm [shape: f32[4,128], index: 0, kind: input, shape index: {}]
  %s1 = inlined_call_operand.hbm [shape: f32[4,128], index: 1, kind: input, shape index: {}]
  %s2 = inlined_call_operand.hbm [shape: f32[4,128], index: 2, kind: output, shape index: {}]
  %s3 = sld [smem:[#allocation0]]
  $region26: #{tpu_custom_call.1} parent=0
    _
  %s5 = ssub.s32 1, %s3
  %s6 = scalar_select 0, %s5, %s3
  $region1: #{tpu_custom_call.1} parent=0
    #allocation2 [shape = 'u8[2048]{0}', space=vmem, size = 0x800, scoped, tag = 'input window, operand 0, single buffered']
    #allocation3 [shape = 's32[1]{0}', space=sflag, size = 0x4, scoped, tag = 'scoped memory for tpu_custom_call.1']
    #allocation4 [shape = 's32[1]{0}', space=sflag, size = 0x4, scoped, tag = 'scoped memory for tpu_custom_call.1']
    #allocation5 [shape = 'u8[2048]{0}', space=vmem, size = 0x800, scoped, tag = 'input window, operand 1, single buffered']
    #allocation6 [shape = 's32[1]{0}', space=sflag, size = 0x4, scoped, tag = 'scoped memory for tpu_custom_call.1']
    #allocation7 [shape = 'u8[2048]{0}', space=vmem, size = 0x800, scoped, tag = 'output window, operand 0, single buffered']
    %7 = vsyncpa [#allocation3], 0
    %8 = vsyncpa [#allocation6], 0
    %9 = vsyncpa [#allocation4], 0
    // Predicated region
    $region2: #{tpu_custom_call.1} parent=1 // pred_check
      _
    $region3: #{tpu_custom_call.1} parent=1 // pred_check_branch
      %11 = sbr.rel (0) target = $region5
    $region4: #{tpu_custom_call.1} parent=1 // pred_region
      %s13 = ssub.s32 64, 64
      %14 = vsyncadd [#allocation3], %s13
      %s16 = sshll.u32 [#allocation2], 4
      %s17 = int_to_ptr.vmem [resolvable:$true] %s16
      %19 = dma.hbm_to_vmem [thread:$0]  %s0, 64, %s17, [#allocation3]
    $region5: #{tpu_custom_call.1} parent=1 // pred_fallthru
      _
    // Predicated region
    $region6: #{tpu_custom_call.1} parent=1 // pred_check
      _
    $region7: #{tpu_custom_call.1} parent=1 // pred_check_branch
      %21 = sbr.rel (0) target = $region9
    $region8: #{tpu_custom_call.1} parent=1 // pred_region
      %s23 = ssub.s32 64, 64
      %24 = vsyncadd [#allocation6], %s23
      %s26 = sshll.u32 [#allocation5], 4
      %s27 = int_to_ptr.vmem [resolvable:$true] %s26
      %29 = dma.hbm_to_vmem [thread:$0]  %s1, 64, %s27, [#allocation6]
    $region9: #{tpu_custom_call.1} parent=1 // pred_fallthru
      _
    // Predicated region
    $region10: #{tpu_custom_call.1} parent=1 // pred_check
      _
    $region11: #{tpu_custom_call.1} parent=1 // pred_check_branch
      %31 = sbr.rel (0) target = $region13
    $region12: #{tpu_custom_call.1} parent=1 // pred_region
      %32 = dma.done [#allocation3], 64
    $region13: #{tpu_custom_call.1} parent=1 // pred_fallthru
      _
    // Predicated region
    $region14: #{tpu_custom_call.1} parent=1 // pred_check
      _
    $region15: #{tpu_custom_call.1} parent=1 // pred_check_branch
      %34 = sbr.rel (0) target = $region17
    $region16: #{tpu_custom_call.1} parent=1 // pred_region
      %35 = dma.done [#allocation6], 64
    $region17: #{tpu_custom_call.1} parent=1 // pred_fallthru
      _
    %s36 = scvt.s32.f32 0
    %v37 = vld [vmem:[#allocation2] sm:$0xf]
    %v38 = vld [vmem:[#allocation5] sm:$0xf]
    %v39 = vstv %s36
    %v40 = vmul.f32 %v39, %v38
    %v41 = vadd.f32 %v37, %v40
    %v42 = vand.u32 2147483647, %v41
    %vm43 = vcmp.le.f32.partialorder %v42, 0.7853982
    %vm44 = vcmp.lt.s32.totalorder %v41, 0
    %v45 = vand.u32 %v41, 2139095040
    %v46 = vshrl.u32 %v45, 23
    %v47 = vsub.s32 %v46, 127
    %v48 = vand.u32 2147483647, %v41
    %v49 = vand.u32 %v48, 8388607
    %v50 = vor.u32 %v49, 8388608
    %v51 = vsub.s32 0, %v50
    %v52 = vadd.s32 %v47, 1
    %vm53 = vcmp.gt.s32.totalorder %v52, 0
    %v54 = vsel %vm53, %v52, 0
    %v55 = vshrl.u32 %v54, 5
    %v56 = vand.u32 %v54, 31
    %v57 = vsub.s32 32, %v56
    %v58 = vshrl.u32 683565275, %v57
    %v59 = vshll.u32 683565275, %v56
    %v60 = vshrl.u32 2475754826, %v57
    %v61 = vor.u32 %v59, %v60
    %v62 = vshll.u32 2475754826, %v56
    %v63 = vshrl.u32 2131351028, %v57
    %v64 = vor.u32 %v62, %v63
    %v65 = vshll.u32 2131351028, %v56
    %v66 = vshrl.u32 2102212464, %v57
    %v67 = vor.u32 %v65, %v66
    %v68 = vshll.u32 2102212464, %v56
    %v69 = vshrl.u32 920167782, %v57
    %v70 = vor.u32 %v68, %v69
    %v71 = vshll.u32 920167782, %v56
    %v72 = vshrl.u32 1326507024, %v57
    %v73 = vor.u32 %v71, %v72
    %vm74 = vcmp.lt.s32.totalorder %v55, 1
    %vm75 = vcmp.lt.s32.totalorder %v55, 2
    %vm76 = vcmp.lt.s32.totalorder %v55, 3
    %vm77 = vcmp.lt.s32.totalorder %v55, 4
    %v78 = vsel %vm74, %v58, %v61
    %v79 = vsel %vm77, %v67, 2102212464
    %v80 = vsel %vm76, %v64, %v79
    %v81 = vsel %vm75, %v78, %v80
    %v82 = vsel %vm74, %v61, %v64
    %v83 = vsel %vm77, %v70, 920167782
    %v84 = vsel %vm76, %v67, %v83
    %v85 = vsel %vm75, %v82, %v84
    %v86 = vsel %vm74, %v64, %v67
    %v87 = vsel %vm77, %v73, 1326507024
    %v88 = vsel %vm76, %v70, %v87
    %v89 = vsel %vm75, %v86, %v88
    %v90 = vshll.u32 %v50, 8
    %v91 = vmul.u32.u64.compose %v90, %v89
    %v92 = vextract.low.u32 %v91
    %v93 = vextract.high.u32 %v91
    %v94 = vmul.u32.u64.compose %v90, %v85
    %v95 = vextract.low.u32 %v94
    %v96 = vextract.high.u32 %v94
    %v97 = vmul.u32 %v90, %v81
    %v98 = vadd.s32 %v93, %v95
    %vm99 = vc.u32 %v93, %v95
    %v100 = vadd.s32 %v96, 1
    %v101 = vsel %vm99, %v100, %v96
    %v102 = vadd.s32 %v97, %v101
    %v103 = vadd.s32 %v102, 536870912
    %v104 = vshrl.u32 %v103, 30
    %v105 = vshll.u32 %v104, 30
    %v106 = vsub.s32 %v102, %v105
    %vm107 = vcmp.lt.s32.totalorder %v106, 0
    %v108 = vsub.s32 0, %v106
    %v109 = vsel %vm107, %v108, %v106
    %v110 = vclz %v109
    %v111 = vsub.s32 %v110, 2
    %vm112 = vcmp.gt.s32.totalorder 0, %v111
    %v113 = vsel %vm112, 0, %v111
    %v114 = vsub.s32 32, %v113
    %v115 = vshll.u32 %v106, %v113
    %v116 = vshrl.u32 %v98, %v114
    %v117 = vor.u32 %v115, %v116
    %v118 = vsub.s32 4294967266, %v113
    %v119 = vadd.s32 %v118, 127
    %v120 = vshll.u32 %v119, 23
    %v121 = vor.u32 4788187, %v120
    %v122 = vand.u32 2147483647, %v121
    %v124 = vcvt.s32.f32 %v117
    %v125 = vmul.f32 %v124, %v122
    %v126 = vxor.u32 %v125, 2147483648
    %v127 = vsel %vm44, %v126, %v125
    %v128 = vsub.s32 4, %v104
    %v129 = vsel %vm44, %v128, %v104
    %v130 = vsel %vm43, %v41, %v127
    %v131 = vsel %vm43, 0, %v129
    %v132 = vcosq.f32.pop %v130
    %v133 = vsinq.f32.pop %v130
    %vm134 = vweird.f32 %v41
    %v135 = vadd.s32 %v131, 3
    %v136 = vand.u32 %v135, 3
    %vm137 = vcmp.lt.s32.totalorder %v136, 2
    %vm138 = vcmp.eq.s32.totalorder %v136, 0
    %v139 = vxor.u32 %v133, 2147483648
    %v140 = vsel %vm138, %v132, %v139
    %vm141 = vcmp.eq.s32.totalorder %v136, 2
    %v142 = vxor.u32 %v132, 2147483648
    %v143 = vsel %vm141, %v142, %v133
    %v144 = vsel %vm137, %v140, %v143
    %v145 = vsel %vm134, nan, %v144
    %146 = vst [vmem:[#allocation7] sm:$0xf] %v145
    // Predicated region
    $region18: #{tpu_custom_call.1} parent=1 // pred_check
      _
    $region19: #{tpu_custom_call.1} parent=1 // pred_check_branch
      %148 = sbr.rel (0) target = $region21
    $region20: #{tpu_custom_call.1} parent=1 // pred_region
      %s150 = ssub.s32 64, 64
      %151 = vsyncadd [#allocation4], %s150
      %s153 = sshll.u32 [#allocation7], 4
      %s154 = int_to_ptr.vmem [resolvable:$true] %s153
      %156 = dma.vmem_to_hbm [thread:$0]  %s154, 64, %s2, [#allocation4]
    $region21: #{tpu_custom_call.1} parent=1 // pred_fallthru
      _
    // Predicated region
    $region22: #{tpu_custom_call.1} parent=1 // pred_check
      _
    $region23: #{tpu_custom_call.1} parent=1 // pred_check_branch
      %158 = sbr.rel (0) target = $region25
    $region24: #{tpu_custom_call.1} parent=1 // pred_region
      %159 = dma.done [#allocation4], 64
    $region25: #{tpu_custom_call.1} parent=1 // pred_fallthru
      _
    %160 = vsyncpa [#allocation3], 1
    %161 = vsyncpa [#allocation6], 1
    %162 = vsyncpa [#allocation4], 1

</llo_original>
